<compile_context>
chip_gen: v7x
topology: tpu7x:2x2x1
jax: 0.10.0
libtpu: 0.0.40
codegen_flags: <defaults>
</compile_context>

<pallas_src>
import functools

import jax
import jax.numpy as jnp
from jax.experimental import pallas as pl
from jax.experimental.pallas import tpu as pltpu


def _round_up(x, m):
    return (x + m - 1) // m * m


# ---------------------------------------------------------------------------
# Generation-aware tile / VMEM policy
# ---------------------------------------------------------------------------
def _hw_policy():
    vmem_bytes = 64 * 1024 * 1024  # conservative default (v7x-class)
    try:
        vmem_bytes = int(getattr(pltpu.get_tpu_info(),
                                 "vmem_capacity_bytes", vmem_bytes))
    except Exception:
        pass
    if vmem_bytes >= 96 * 1024 * 1024:
        # v5e / v6e: 128 MiB VMEM -> big tiles cut per-step overhead and
        # operand re-reads.
        return {"vmem_limit": 96 * 1024 * 1024,
                "tm_cap": 1024, "tn_cap": 1024, "tk_cap": 1024}
    # v7x-class: 64 MiB VMEM -> keep 512-class output tiles, longer K tile so
    # the (smaller, bf16) per-step DMA stays hidden.
    return {"vmem_limit": 48 * 1024 * 1024,
            "tm_cap": 512, "tn_cap": 512, "tk_cap": 1024}


_POLICY = _hw_policy()


def _padded_kn(K, N):
    """Tile-padded (Kp, Np) for a weight of logical shape (K, N)."""
    tk = min(_POLICY["tk_cap"], _round_up(K, 128))
    tn = min(_POLICY["tn_cap"], _round_up(N, 128))
    return _round_up(K, tk), _round_up(N, tn)


# ---------------------------------------------------------------------------
# Kernels (2-D refs; head axis, if any, is squeezed away by the BlockSpec)
# ---------------------------------------------------------------------------
def _matmul_kernel(x_ref, w_ref, o_ref, acc_ref, *, k_axis, apply_relu):
    k = pl.program_id(k_axis)

    @pl.when(k == 0)
    def _():
        acc_ref[...] = jnp.zeros_like(acc_ref)

    acc_ref[...] += jnp.dot(x_ref[...], w_ref[...],
                            preferred_element_type=jnp.float32)

    @pl.when(k == pl.num_programs(k_axis) - 1)
    def _():
        y = acc_ref[...]
        if apply_relu:
            y = jnp.maximum(y, 0.0)
        o_ref[...] = y.astype(o_ref.dtype)


def _matmul_bias_kernel(x_ref, w_ref, b_ref, o_ref, acc_ref, *, k_axis,
                        apply_relu):
    k = pl.program_id(k_axis)

    @pl.when(k == 0)
    def _():
        acc_ref[...] = jnp.zeros_like(acc_ref)

    acc_ref[...] += jnp.dot(x_ref[...], w_ref[...],
                            preferred_element_type=jnp.float32)

    @pl.when(k == pl.num_programs(k_axis) - 1)
    def _():
        y = acc_ref[...] + b_ref[...]        # (1, tn) broadcasts over rows
        if apply_relu:
            y = jnp.maximum(y, 0.0)
        o_ref[...] = y.astype(o_ref.dtype)


# ---------------------------------------------------------------------------
# Generic wrapper: act(x @ w (+ b)) with optional leading head axis
# ---------------------------------------------------------------------------
def _pallas_matmul(x, w, b=None, *, apply_relu=True):
    """x: (M, K) or (2, M, K) (any float dtype, un-padded).
    w: (Kp, Np) or (2, Kp, Np) bf16, already tile-padded.
    b: (1, Np) / (2, 1, Np) f32 or None.
    Returns f32 (M, Np) / (2, M, Np); caller slices the valid N columns."""
    heads = (x.ndim == 3)
    if heads:
        H, M, K = x.shape
    else:
        (M, K), H = x.shape, 1
    Kp, Np = w.shape[-2:]

    # Recover the tile plan from the pre-padded weight shape.
    tk = min(_POLICY["tk_cap"], Kp)
    tn = min(_POLICY["tn_cap"], Np)
    tm = min(_POLICY["tm_cap"], _round_up(M, 16))   # bf16 sublane tile = 16
    Mp = _round_up(M, tm)

    # Cast activations to bf16 for the MXU, zero-pad to full tiles
    # (K-padding contributes zero to the dot; padded rows are sliced off).
    x = x.astype(jnp.bfloat16)
    if (Mp, Kp) != (M, K):
        pad = ((0, 0),) * (x.ndim - 2) + ((0, Mp - M), (0, Kp - K))
        x = jnp.pad(x, pad)

    gm, gn, gk = Mp // tm, Np // tn, Kp // tk

    if heads:
        grid = (H, gm, gn, gk)
        k_axis = 3
        x_spec = pl.BlockSpec((pl.Squeezed(), tm, tk),
                              lambda h, i, j, k: (h, i, k))
        w_spec = pl.BlockSpec((pl.Squeezed(), tk, tn),
                              lambda h, i, j, k: (h, k, j))
        o_spec = pl.BlockSpec((pl.Squeezed(), tm, tn),
                              lambda h, i, j, k: (h, i, j))
        b_spec = pl.BlockSpec((pl.Squeezed(), 1, tn),
                              lambda h, i, j, k: (h, 0, j))
        out_shape = jax.ShapeDtypeStruct((H, Mp, Np), jnp.float32)
        semantics = ("parallel", "parallel", "parallel", "arbitrary")
    else:
        grid = (gm, gn, gk)
        k_axis = 2
        x_spec = pl.BlockSpec((tm, tk), lambda i, j, k: (i, k))
        w_spec = pl.BlockSpec((tk, tn), lambda i, j, k: (k, j))
        o_spec = pl.BlockSpec((tm, tn), lambda i, j, k: (i, j))
        b_spec = pl.BlockSpec((1, tn), lambda i, j, k: (0, j))
        out_shape = jax.ShapeDtypeStruct((Mp, Np), jnp.float32)
        semantics = ("parallel", "parallel", "arbitrary")

    # Cost estimate including tile re-reads (x re-read per N tile, w re-read
    # per M tile) and one f32 output write.
    flops = 2 * H * Mp * Np * Kp
    bytes_accessed = (2 * H * Mp * Kp * gn
                      + 2 * H * Kp * Np * gm
                      + 4 * H * Mp * Np)
    if b is not None:
        bytes_accessed += 4 * H * Np * gm

    compiler_params = pltpu.CompilerParams(
        dimension_semantics=semantics,
        vmem_limit_bytes=_POLICY["vmem_limit"],
    )
    cost = pl.CostEstimate(flops=flops, transcendentals=0,
                           bytes_accessed=bytes_accessed)

    if b is None:
        kernel = functools.partial(_matmul_kernel, k_axis=k_axis,
                                   apply_relu=apply_relu)
        in_specs = [x_spec, w_spec]
        operands = (x, w)
    else:
        kernel = functools.partial(_matmul_bias_kernel, k_axis=k_axis,
                                   apply_relu=apply_relu)
        in_specs = [x_spec, w_spec, b_spec]
        operands = (x, w, b)

    out = pl.pallas_call(
        kernel,
        out_shape=out_shape,
        grid_spec=pltpu.PrefetchScalarGridSpec(
            num_scalar_prefetch=0,
            grid=grid,
            in_specs=in_specs,
            out_specs=o_spec,
            scratch_shapes=[pltpu.VMEM((tm, tn), jnp.float32)],
        ),
        compiler_params=compiler_params,
        cost_estimate=cost,
    )(*operands)

    return out[..., :M, :]


# ---------------------------------------------------------------------------
# Parameter init (mimics nn.Linear uniform(-1/sqrt(in), 1/sqrt(in))).
# Weights are stored transposed (K, N), tile-padded, bf16, and (if not shared)
# pre-stacked to (2, Kp, Np) so the forward pass does no weight restacking.
# ---------------------------------------------------------------------------
def init_fully_connected_params(key, input_dim, output_dim,
                                use_bias=False, share_weights=False):
    k_rna_w, k_rna_b, k_pro_w, k_pro_b = jax.random.split(key, 4)
    bound = input_dim ** -0.5
    Kp, Np = _padded_kn(input_dim, output_dim)

    def make_w(k):
        w = jax.random.uniform(k, (input_dim, output_dim), jnp.float32,
                               -bound, bound)
        wp = jnp.zeros((Kp, Np), jnp.bfloat16)
        wp = wp.at[:input_dim, :output_dim].set(w.astype(jnp.bfloat16))
        return w, wp

    def make_b(k):
        bv = jax.random.uniform(k, (output_dim,), jnp.float32, -bound, bound)
        bp = jnp.zeros((1, Np), jnp.float32).at[0, :output_dim].set(bv)
        return bv, bp

    w_rna, w_rna_p = make_w(k_rna_w)
    b_rna = b_rna_p = None
    if use_bias:
        b_rna, b_rna_p = make_b(k_rna_b)

    params = {
        "input_dim": input_dim,
        "output_dim": output_dim,
        "use_bias": use_bias,
        "share_weights": share_weights,
        # f32 copies kept only for the reference check in __main__.
        "w_rna_f32": w_rna,
        "b_rna_f32": b_rna,
    }

    if share_weights:
        params.update({
            "w": w_rna_p,                       # (Kp, Np) bf16
            "b": b_rna_p,                       # (1, Np) f32 or None
            "w_pro_f32": w_rna,
            "b_pro_f32": b_rna,
        })
    else:
        w_pro, w_pro_p = make_w(k_pro_w)
        b_pro = b_pro_p = None
        if use_bias:
            b_pro, b_pro_p = make_b(k_pro_b)
        params.update({
            "w2": jnp.stack([w_rna_p, w_pro_p], axis=0),   # (2, Kp, Np) bf16
            "b2": (jnp.stack([b_rna_p, b_pro_p], axis=0)
                   if use_bias else None),                  # (2, 1, Np) f32
            "w_pro_f32": w_pro,
            "b_pro_f32": b_pro,
        })
    return params


# ---------------------------------------------------------------------------
# Forward pass matching FullyConnected.forward (dropout p=0 -> identity)
# ---------------------------------------------------------------------------
def fully_connected_forward(params, rna_inputs, protein_inputs, *,
                            apply_relu=True):
    n = params["output_dim"]
    m_rna = rna_inputs.shape[0]
    m_pro = protein_inputs.shape[0]

    if params["share_weights"]:
        # Single weight: fold both heads into M -> one matmul, no weight
        # duplication, no activation padding to max(M).
        x = jnp.concatenate([rna_inputs, protein_inputs], axis=0)
        out = _pallas_matmul(x, params["w"], params["b"],
                             apply_relu=apply_relu)
        return out[:m_rna, :n], out[m_rna:m_rna + m_pro, :n]

    if m_rna == m_pro:
        # Fused dual-head call: one dispatch, head axis leading + 'parallel'
        # (megacore-shardable on v7x).
        x2 = jnp.stack([rna_inputs, protein_inputs], axis=0)
        out2 = _pallas_matmul(x2, params["w2"], params["b2"],
                              apply_relu=apply_relu)
        return out2[0, :, :n], out2[1, :, :n]

    # Unequal batch sizes: two per-head calls instead of padding the smaller
    # head up to max(M).
    b2 = params["b2"]
    rna_out = _pallas_matmul(rna_inputs, params["w2"][0],
                             None if b2 is None else b2[0],
                             apply_relu=apply_relu)
    pro_out = _pallas_matmul(protein_inputs, params["w2"][1],
                             None if b2 is None else b2[1],
                             apply_relu=apply_relu)
    return rna_out[:, :n], pro_out[:, :n]


# ---------------------------------------------------------------------------
# Demo / self-check
# ---------------------------------------------------------------------------
if __name__ == "__main__":
    key = jax.random.PRNGKey(0)
    k_param, k_rna, k_pro = jax.random.split(key, 3)

    # NOTE: at these tiny demo shapes the pallas_call is dominated by per-step
    # overhead; the kernel structure pays off once M*N*K is large.
    batch = 8
    input_dim = 32
    output_dim = 64

    rna_inputs = jax.random.normal(k_rna, (batch, input_dim), jnp.float32)
    protein_inputs = jax.random.normal(k_pro, (batch, input_dim), jnp.float32)

    def ref(x, w, b, relu=True):
        # Reference with the same bf16 operand rounding, f32 accumulation.
        xb = x.astype(jnp.bfloat16).astype(jnp.float32)
        wb = w.astype(jnp.bfloat16).astype(jnp.float32)
        y = xb @ wb
        if b is not None:
            y = y + b
        return jnp.maximum(y, 0.0) if relu else y

    # 1) Default config: no bias, separate weights, equal batch (fused path).
    params = init_fully_connected_params(k_param, input_dim, output_dim,
                                         use_bias=False, share_weights=False)
    rna_out, pro_out = fully_connected_forward(params, rna_inputs,
                                               protein_inputs)
    jax.block_until_ready((rna_out, pro_out))
    assert rna_out.shape == (batch, output_dim)
    assert pro_out.shape == (batch, output_dim)
    assert jnp.allclose(rna_out, ref(rna_inputs, params["w_rna_f32"], None),
                        atol=2e-3, rtol=2e-3)
    assert jnp.allclose(pro_out, ref(protein_inputs, params["w_pro_f32"], None),
                        atol=2e-3, rtol=2e-3)

    # 2) bias + shared weights (single concatenated-M matmul path).
    params_s = init_fully_connected_params(k_param, input_dim, output_dim,
                                           use_bias=True, share_weights=True)
    rna_s, pro_s = fully_connected_forward(params_s, rna_inputs,
                                           protein_inputs)
    jax.block_until_ready((rna_s, pro_s))
    assert jnp.allclose(
        rna_s, ref(rna_inputs, params_s["w_rna_f32"], params_s["b_rna_f32"]),
        atol=2e-3, rtol=2e-3)
    assert jnp.allclose(
        pro_s, ref(protein_inputs, params_s["w_pro_f32"], params_s["b_pro_f32"]),
        atol=2e-3, rtol=2e-3)

    # 3) Unequal batch sizes (per-head call path), bias on.
    params_u = init_fully_connected_params(k_param, input_dim, output_dim,
                                           use_bias=True, share_weights=False)
    pro_u_in = jax.random.normal(jax.random.PRNGKey(1),
                                 (2 * batch, input_dim), jnp.float32)
    rna_u, pro_u = fully_connected_forward(params_u, rna_inputs, pro_u_in)
    jax.block_until_ready((rna_u, pro_u))
    assert jnp.allclose(
        rna_u, ref(rna_inputs, params_u["w_rna_f32"], params_u["b_rna_f32"]),
        atol=2e-3, rtol=2e-3)
    assert jnp.allclose(
        pro_u, ref(pro_u_in, params_u["w_pro_f32"], params_u["b_pro_f32"]),
        atol=2e-3, rtol=2e-3)

    print("KERNEL_OK")
</pallas_src>

<mosaic_0001>
module attributes {stable_mosaic.version = 11 : i64} {
  func.func @_matmul_kernel(%arg0: i32, %arg1: i32, %arg2: i32, %arg3: i32, %arg4: memref<1x16x128xbf16, #tpu.memory_space<vmem>>, %arg5: memref<1x128x128xbf16, #tpu.memory_space<vmem>>, %arg6: memref<1x16x128xf32, #tpu.memory_space<vmem>>, %arg7: memref<16x128xf32, #tpu.memory_space<vmem>>) attributes {dimension_semantics = [#tpu.dimension_semantics<parallel>, #tpu.dimension_semantics<parallel>, #tpu.dimension_semantics<parallel>, #tpu.dimension_semantics<arbitrary>], iteration_bounds = array<i64: 2, 1, 1, 1>, scalar_prefetch = 0 : i64, scratch_operands = 1 : i64, tpu.core_type = #tpu.core_type<tc>, window_params = [{transform_indices = @transform_0, window_bounds = array<i64: 1, 16, 128>}, {transform_indices = @transform_1, window_bounds = array<i64: 1, 128, 128>}, {transform_indices = @transform_2, window_bounds = array<i64: 1, 16, 128>}]} {
    %c0_i32 = arith.constant 0 : i32
    %0 = arith.cmpi eq, %arg3, %c0_i32 : i32
    %1 = arith.extui %0 : i1 to i32
    %c0_i32_0 = arith.constant 0 : i32
    %2 = arith.cmpi ne, %1, %c0_i32_0 : i32
    scf.if %2 {
      %cst_12 = arith.constant 0.000000e+00 : f32
      %14 = vector.broadcast %cst_12 : f32 to vector<16x128xf32>
      %c0_13 = arith.constant 0 : index
      %c0_14 = arith.constant 0 : index
      %15 = vector.load %arg7[%c0_13, %c0_14] : memref<16x128xf32, #tpu.memory_space<vmem>>, vector<16x128xf32>
      tpu.vector_store %arg7[%c0_13, %c0_14], %14 {strides = array<i32>} : memref<16x128xf32, #tpu.memory_space<vmem>>, vector<16x128xf32>,
    } else {
    }
    %c0 = arith.constant 0 : index
    %c0_1 = arith.constant 0 : index
    %3 = vector.load %arg7[%c0, %c0_1] : memref<16x128xf32, #tpu.memory_space<vmem>>, vector<16x128xf32>
    %c0_2 = arith.constant 0 : index
    %c0_3 = arith.constant 0 : index
    %c0_4 = arith.constant 0 : index
    %4 = vector.load %arg4[%c0_2, %c0_3, %c0_4] : memref<1x16x128xbf16, #tpu.memory_space<vmem>>, vector<1x16x128xbf16>
    %5 = vector.shape_cast %4 : vector<1x16x128xbf16> to vector<16x128xbf16>
    %c0_5 = arith.constant 0 : index
    %c0_6 = arith.constant 0 : index
    %c0_7 = arith.constant 0 : index
    %6 = vector.load %arg5[%c0_5, %c0_6, %c0_7] : memref<1x128x128xbf16, #tpu.memory_space<vmem>>, vector<1x128x128xbf16>
    %7 = vector.shape_cast %6 : vector<1x128x128xbf16> to vector<128x128xbf16>
    %cst = arith.constant dense<0.000000e+00> : vector<16x128xf32>
    %8 = tpu.matmul %5, %7, %cst {dimension_numbers = #tpu.dot_dimension_numbers<[1], [0], [0], [1], [0, 0, 1, 1], [], []>} : vector<16x128xbf16>, vector<128x128xbf16>, vector<16x128xf32> -> vector<16x128xf32>
    %9 = arith.addf %3, %8 : vector<16x128xf32>
    %c0_8 = arith.constant 0 : index
    %c0_9 = arith.constant 0 : index
    %10 = vector.load %arg7[%c0_8, %c0_9] : memref<16x128xf32, #tpu.memory_space<vmem>>, vector<16x128xf32>
    tpu.vector_store %arg7[%c0_8, %c0_9], %9 {strides = array<i32>} : memref<16x128xf32, #tpu.memory_space<vmem>>, vector<16x128xf32>,
    %c0_i32_10 = arith.constant 0 : i32
    %11 = arith.cmpi eq, %arg3, %c0_i32_10 : i32
    %12 = arith.extui %11 : i1 to i32
    %c0_i32_11 = arith.constant 0 : i32
    %13 = arith.cmpi ne, %12, %c0_i32_11 : i32
    scf.if %13 {
      %c0_12 = arith.constant 0 : index
      %c0_13 = arith.constant 0 : index
      %14 = vector.load %arg7[%c0_12, %c0_13] : memref<16x128xf32, #tpu.memory_space<vmem>>, vector<16x128xf32>
      %cst_14 = arith.constant 0.000000e+00 : f32
      %15 = vector.broadcast %cst_14 : f32 to vector<16x128xf32>
      %16 = arith.maximumf %14, %15 : vector<16x128xf32>
      %c0_15 = arith.constant 0 : index
      %c0_16 = arith.constant 0 : index
      %c0_17 = arith.constant 0 : index
      %17 = vector.load %arg6[%c0_15, %c0_16, %c0_17] : memref<1x16x128xf32, #tpu.memory_space<vmem>>, vector<1x16x128xf32>
      %18 = vector.shape_cast %17 : vector<1x16x128xf32> to vector<16x128xf32>
      %19 = vector.shape_cast %16 : vector<16x128xf32> to vector<1x16x128xf32>
      tpu.vector_store %arg6[%c0_15, %c0_16, %c0_17], %19 {strides = array<i32>} : memref<1x16x128xf32, #tpu.memory_space<vmem>>, vector<1x16x128xf32>,
    } else {
    }
    return
  }
  func.func @transform_0(%arg0: i32, %arg1: i32, %arg2: i32, %arg3: i32) -> (i32, i32, i32) {
    %c0_i32 = arith.constant 0 : i32
    return %arg0, %arg1, %arg3 : i32, i32, i32
  }
  func.func @transform_1(%arg0: i32, %arg1: i32, %arg2: i32, %arg3: i32) -> (i32, i32, i32) {
    %c0_i32 = arith.constant 0 : i32
    return %arg0, %arg3, %arg2 : i32, i32, i32
  }
  func.func @transform_2(%arg0: i32, %arg1: i32, %arg2: i32, %arg3: i32) -> (i32, i32, i32) {
    %c0_i32 = arith.constant 0 : i32
    return %arg0, %arg1, %arg2 : i32, i32, i32
  }
}

</mosaic_0001>

<llo_original>
// kernel: tpu_custom_call.1
$region0: #{tpu_custom_call.1}
  #allocation0 [shape = 'u32[]', space=smem, size = 0x4, offset = 0x4, fixed_abs, tag = 'smem constant byte address 0x4 - core index']
  #allocation1 [shape = 'u32[144,128]{1,0:T(1,128)}', space=vmem, size = 0x12000, scoped, tag = 'internal scratch']
  #allocation2 [shape = 'f32[16,128]{1,0:T(8,128)}', space=vmem, size = 0x2000, scoped, tag = 'scratch operand']
  %s0 = inlined_call_operand.hbm [shape: bf16[2,16,128], index: 0, kind: input, shape index: {}]
  %s1 = inlined_call_operand.hbm [shape: bf16[2,128,128], index: 1, kind: input, shape index: {}]
  %s2 = inlined_call_operand.hbm [shape: f32[2,16,128], index: 2, kind: output, shape index: {}]
  %s3 = sld [smem:[#allocation0]]
  $region57: #{tpu_custom_call.1} parent=0
    _
  %s5 = ssub.s32 1, %s3
  %s6 = scalar_select 0, %s5, %s3
  $region1: #{tpu_custom_call.1} parent=0
    #allocation3 [shape = 'u8[8192]{0}', space=vmem, size = 0x2000, scoped, tag = 'input window, operand 0']
    #allocation4 [shape = 's32[2]{0}', space=sflag, size = 0x8, scoped, tag = 'scoped memory for tpu_custom_call.1']
    #allocation5 [shape = 's32[2]{0}', space=sflag, size = 0x8, scoped, tag = 'scoped memory for tpu_custom_call.1']
    #allocation6 [shape = 'u8[65536]{0}', space=vmem, size = 0x10000, scoped, tag = 'input window, operand 1']
    #allocation7 [shape = 's32[2]{0}', space=sflag, size = 0x8, scoped, tag = 'scoped memory for tpu_custom_call.1']
    #allocation8 [shape = 'u8[16384]{0}', space=vmem, size = 0x4000, scoped, tag = 'output window, operand 0']
    %7 = vsyncpa [#allocation4], 0
    %s8 = scalar_lea.sflag [#allocation4], 1
    %9 = vsyncpa %s8, 0
    %10 = vsyncpa [#allocation7], 0
    %s11 = scalar_lea.sflag [#allocation7], 1
    %12 = vsyncpa %s11, 0
    %13 = vsyncpa [#allocation5], 0
    %s14 = scalar_lea.sflag [#allocation5], 1
    %15 = vsyncpa %s14, 0
    loop: start=0, step=1, limit=4
    $region2: #{tpu_custom_call.1} parent=1 // loop_pre_header
      _
    $region3: #{tpu_custom_call.1} parent=1 // loop_header
      %s17 = sphi 0, %s21
      %p18 = scmp.ge.s32.totalorder %s17, 4
      %s24 = sphi 0, %s50
      %s25 = sphi 0, %s46
      %s26 = sphi 0, %s42
      %s27 = sphi 0, %s38
      %s28 = sphi 0, %s24
      %s29 = sphi 0, %s25
      %s30 = sphi 0, %s26
      %s31 = sphi 0, %s27
      %s32 = sphi 0, %s28
      %s33 = sphi 0, %s29
      %s34 = sphi 0, %s30
      %s35 = sphi 0, %s31
      %s57 = sphi 0, %s59
      %s60 = sphi 0, %s57
      %s61 = sphi 0, %s60
      %s77 = sphi 0, %s61
      %s87 = sphi 0, %s89
      %s90 = sphi 0, %s87
      %s91 = sphi 0, %s90
      %s107 = sphi 0, %s91
      %s117 = sphi 0, %s119
      %s120 = sphi 0, %s117
      %s121 = sphi 0, %s120
      %s137 = sphi 0, %s121
    $region4: #{tpu_custom_call.1} parent=1 // loop_header_branch
      %20 = sbr.rel (%p18) target = $region8
    $region5: #{tpu_custom_call.1} parent=1 // loop_body
      %s22 = ssub.s32 %s17, 1
      %s23 = ssub.s32 %s17, 2
      %s36 = sadd.s32 1, %s27
      %p37 = scmp.ge.s32.totalorder %s36, 1
      %s38 = scalar_select %p37, 0, %s36
      %s39 = sadd.s32 1, %s26
      %s40 = scalar_select %p37, %s39, %s26
      %p41 = scmp.ge.s32.totalorder %s40, 1
      %s42 = scalar_select %p41, 0, %s40
      %s43 = sadd.s32 1, %s25
      %s44 = scalar_select %p41, %s43, %s25
      %p45 = scmp.ge.s32.totalorder %s44, 1
      %s46 = scalar_select %p45, 0, %s44
      %s47 = sadd.s32 1, %s24
      %s48 = scalar_select %p45, %s47, %s24
      %p49 = scmp.ge.s32.totalorder %s48, 2
      %s50 = scalar_select %p49, 0, %s48
      %s51 = ssub.s32 %s24, %s50
      %s52 = ssub.s32 %s25, %s46
      %s53 = sor.u32 %s51, %s52
      %s54 = ssub.s32 %s27, %s38
      %s55 = sor.u32 %s53, %s54
      %p56 = scmp.eq.s32.totalorder %s55, 0
      %s58 = sadd.s32 %s57, 1
      %s59 = scalar_select %p56, %s57, %s58
      %p62 = pneg %p56
      %p63 = scmp.eq.s32.totalorder %s17, 1
      %p64 = por %p62, %p63
      %p65 = scmp.ne.s32.totalorder %s57, %s60
      %p66 = scmp.eq.s32.totalorder %s17, 0
      %p67 = por %p65, %p66
      %p68 = scmp.ne.s32.totalorder %s57, %s60
      %p69 = scmp.eq.s32.totalorder %s22, 1
      %p70 = por %p68, %p69
      %p71 = scmp.ne.s32.totalorder %s60, %s61
      %p72 = scmp.eq.s32.totalorder %s22, 0
      %p73 = por %p71, %p72
      %p74 = scmp.ne.s32.totalorder %s60, %s61
      %p75 = scmp.eq.s32.totalorder %s23, 1
      %p76 = por %p74, %p75
      %p78 = scmp.ne.s32.totalorder %s61, %s77
      %p79 = scmp.eq.s32.totalorder %s23, 0
      %p80 = por %p78, %p79
      %s81 = ssub.s32 %s24, %s50
      %s82 = ssub.s32 %s27, %s38
      %s83 = sor.u32 %s81, %s82
      %s84 = ssub.s32 %s26, %s42
      %s85 = sor.u32 %s83, %s84
      %p86 = scmp.eq.s32.totalorder %s85, 0
      %s88 = sadd.s32 %s87, 1
      %s89 = scalar_select %p86, %s87, %s88
      %p92 = pneg %p86
      %p93 = scmp.eq.s32.totalorder %s17, 1
      %p94 = por %p92, %p93
      %p95 = scmp.ne.s32.totalorder %s87, %s90
      %p96 = scmp.eq.s32.totalorder %s17, 0
      %p97 = por %p95, %p96
      %p98 = scmp.ne.s32.totalorder %s87, %s90
      %p99 = scmp.eq.s32.totalorder %s22, 1
      %p100 = por %p98, %p99
      %p101 = scmp.ne.s32.totalorder %s90, %s91
      %p102 = scmp.eq.s32.totalorder %s22, 0
      %p103 = por %p101, %p102
      %p104 = scmp.ne.s32.totalorder %s90, %s91
      %p105 = scmp.eq.s32.totalorder %s23, 1
      %p106 = por %p104, %p105
      %p108 = scmp.ne.s32.totalorder %s91, %s107
      %p109 = scmp.eq.s32.totalorder %s23, 0
      %p110 = por %p108, %p109
      %s111 = ssub.s32 %s24, %s50
      %s112 = ssub.s32 %s25, %s46
      %s113 = sor.u32 %s111, %s112
      %s114 = ssub.s32 %s26, %s42
      %s115 = sor.u32 %s113, %s114
      %p116 = scmp.eq.s32.totalorder %s115, 0
      %s118 = sadd.s32 %s117, 1
      %s119 = scalar_select %p116, %s117, %s118
      %p122 = pneg %p116
      %p123 = scmp.eq.s32.totalorder %s17, 1
      %p124 = por %p122, %p123
      %p125 = scmp.ne.s32.totalorder %s117, %s120
      %p126 = scmp.eq.s32.totalorder %s17, 0
      %p127 = por %p125, %p126
      %p128 = scmp.ne.s32.totalorder %s117, %s120
      %p129 = scmp.eq.s32.totalorder %s22, 1
      %p130 = por %p128, %p129
      %p131 = scmp.ne.s32.totalorder %s120, %s121
      %p132 = scmp.eq.s32.totalorder %s22, 0
      %p133 = por %p131, %p132
      %p134 = scmp.ne.s32.totalorder %s120, %s121
      %p135 = scmp.eq.s32.totalorder %s23, 1
      %p136 = por %p134, %p135
      %p138 = scmp.ne.s32.totalorder %s121, %s137
      %p139 = scmp.eq.s32.totalorder %s23, 0
      %p140 = por %p138, %p139
      %p141 = scmp.le.s32.totalorder 1, %s17
      %p142 = scmp.lt.s32.totalorder %s17, 3
      %p143 = pnand %p141, %p142
      %p144 = pneg %p143
      // Predicated region
      $region9: #{tpu_custom_call.1} parent=5 // pred_check
        _
      $region10: #{tpu_custom_call.1} parent=5 // pred_check_branch
        %146 = sbr.rel (%p143) target = $region12
      $region11: #{tpu_custom_call.1} parent=5 // pred_region
        %s147 = ssub.s32 %s17, 1
      $region12: #{tpu_custom_call.1} parent=5 // pred_fallthru
        _
      %p148 = scmp.lt.s32.totalorder %s17, 2
      // Predicated region
      $region13: #{tpu_custom_call.1} parent=5 // pred_check
        %p149 = pneg %p148
      $region14: #{tpu_custom_call.1} parent=5 // pred_check_branch
        %151 = sbr.rel (%p149) target = $region16
      $region15: #{tpu_custom_call.1} parent=5 // pred_region
        // Predicated region
        $region17: #{tpu_custom_call.1} parent=15 // pred_check
          %p152 = pneg %p67
        $region18: #{tpu_custom_call.1} parent=15 // pred_check_branch
          %154 = sbr.rel (%p152) target = $region20
        $region19: #{tpu_custom_call.1} parent=15 // pred_region
          %s155 = sand.u32 %s57, 1
          %s156 = scalar_lea.sflag [#allocation4], %s155
          %s157 = sand.u32 %s57, 1
          %s158 = smul.addr %s157, 8
          %s159 = scalar_lea.vmem [#allocation3], %s158
          %s160 = smul.u32 2, %s25
          %s162 = ssub.s32 128, 128
          %163 = vsyncadd %s156, %s162
          %s164 = sadd.s32 %s27, %s160
          %s165 = smul.addr %s24, 2
          %s166 = sadd.s32 %s164, %s165
          %s167 = smul.addr %s166, 64
          %s168 = scalar_lea.hbm %s0, %s167
          %s169 = sshll.u32 %s159, 4
          %s170 = int_to_ptr.vmem [resolvable:$true] %s169
          %175 = dma.hbm_to_vmem [thread:$0]  %s168, 128, %s170, %s156, 64, 64, 4
        $region20: #{tpu_custom_call.1} parent=15 // pred_fallthru
          _
        // Predicated region
        $region21: #{tpu_custom_call.1} parent=15 // pred_check
          %p176 = pneg %p97
        $region22: #{tpu_custom_call.1} parent=15 // pred_check_branch
          %178 = sbr.rel (%p176) target = $region24
        $region23: #{tpu_custom_call.1} parent=15 // pred_region
          %s179 = sand.u32 %s87, 1
          %s180 = scalar_lea.sflag [#allocation7], %s179
          %s181 = sand.u32 %s87, 1
          %s182 = smul.addr %s181, 64
          %s183 = scalar_lea.vmem [#allocation6], %s182
          %s184 = smul.u32 16, %s27
          %s186 = ssub.s32 1024, 1024
          %187 = vsyncadd %s180, %s186
          %s188 = sadd.s32 %s26, %s184
          %s189 = smul.addr %s24, 16
          %s190 = sadd.s32 %s188, %s189
          %s191 = smul.addr %s190, 64
          %s192 = scalar_lea.hbm %s1, %s191
          %s193 = sshll.u32 %s183, 4
          %s194 = int_to_ptr.vmem [resolvable:$true] %s193
          %199 = dma.hbm_to_vmem [thread:$0]  %s192, 1024, %s194, %s180, 64, 64, 4
        $region24: #{tpu_custom_call.1} parent=15 // pred_fallthru
          _
      $region16: #{tpu_custom_call.1} parent=5 // pred_fallthru
        _
      %p200 = scmp.le.s32.totalorder 1, %s17
      %p201 = scmp.lt.s32.totalorder %s17, 3
      %p202 = pnand %p200, %p201
      %p203 = pneg %p202
      // Predicated region
      $region25: #{tpu_custom_call.1} parent=5 // pred_check
        _
      $region26: #{tpu_custom_call.1} parent=5 // pred_check_branch
        %205 = sbr.rel (%p202) target = $region28
      $region27: #{tpu_custom_call.1} parent=5 // pred_region
        %s206 = ssub.s32 %s17, 1
        %s207 = sand.u32 %s60, 1
        %s208 = scalar_lea.sflag [#allocation4], %s207
        %s209 = sand.u32 %s60, 1
        %s210 = smul.addr %s209, 8
        %s211 = scalar_lea.vmem [#allocation3], %s210
        // Predicated region
        $region29: #{tpu_custom_call.1} parent=27 // pred_check
          %p212 = pneg %p73
        $region30: #{tpu_custom_call.1} parent=27 // pred_check_branch
          %214 = sbr.rel (%p212) target = $region32
        $region31: #{tpu_custom_call.1} parent=27 // pred_region
          %215 = dma.done %s208, 128
        $region32: #{tpu_custom_call.1} parent=27 // pred_fallthru
          _
        %s216 = sand.u32 %s90, 1
        %s217 = scalar_lea.sflag [#allocation7], %s216
        %s218 = sand.u32 %s90, 1
        %s219 = smul.addr %s218, 64
        %s220 = scalar_lea.vmem [#allocation6], %s219
        // Predicated region
        $region33: #{tpu_custom_call.1} parent=27 // pred_check
          %p221 = pneg %p103
        $region34: #{tpu_custom_call.1} parent=27 // pred_check_branch
          %223 = sbr.rel (%p221) target = $region36
        $region35: #{tpu_custom_call.1} parent=27 // pred_region
          %224 = dma.done %s217, 1024
        $region36: #{tpu_custom_call.1} parent=27 // pred_fallthru
          _
        %s225 = sand.u32 %s60, 1
        %s226 = scalar_lea.sflag [#allocation4], %s225
        %s227 = sand.u32 %s60, 1
        %s228 = smul.addr %s227, 8
        %s229 = scalar_lea.vmem [#allocation3], %s228
        %p230 = pneg %p73
        %p231 = pneg %p70
        %s232 = sand.u32 %s90, 1
        %s233 = scalar_lea.sflag [#allocation7], %s232
        %s234 = sand.u32 %s90, 1
        %s235 = smul.addr %s234, 64
        %s236 = scalar_lea.vmem [#allocation6], %s235
        %p237 = pneg %p103
        %p238 = pneg %p100
        %p239 = pneg %p133
        %p240 = pneg %p130
        %s241 = sand.u32 %s120, 1
        %s242 = scalar_lea.sflag [#allocation5], %s241
        %s243 = sand.u32 %s120, 1
        %s244 = smul.addr %s243, 16
        %s245 = scalar_lea.vmem [#allocation8], %s244
        %s246 = smul.u32 2, %s29
        %s247 = smul.u32 16, %s31
        %s248 = smul.u32 2, %s29
        %p250 = scmp.eq.s32.totalorder %s31, 0
        // Predicated region
        $region37: #{tpu_custom_call.1} parent=27 // pred_check
          %p251 = pneg %p250
        $region38: #{tpu_custom_call.1} parent=27 // pred_check_branch
          %253 = sbr.rel (%p251) target = $region40
        $region39: #{tpu_custom_call.1} parent=27 // pred_region
          %254 = vst [vmem:[#allocation2] sm:$0xff] 0.0
          %255 = vst [vmem:[#allocation2 + $0x8] sm:$0xff] 0.0
        $region40: #{tpu_custom_call.1} parent=27 // pred_fallthru
          _
        %v256 = vld [vmem:[#allocation2] sm:$0xff]
        %v257 = vld [vmem:[#allocation2 + $0x8] sm:$0xff]
        %v258 = vld [vmem:[%s211] sm:$0xf]
        %v259 = vld [vmem:[%s211 + $0x4] sm:$0xf]
        %v260 = vld [vmem:[%s220] sm:$0xf]
        %v261 = vld [vmem:[%s220 + $0x4] sm:$0xf]
        %v262 = vld [vmem:[%s220 + $0x8] sm:$0xf]
        %v263 = vld [vmem:[%s220 + $0xc] sm:$0xf]
        %v264 = vld [vmem:[%s220 + $0x10] sm:$0xf]
        %v265 = vld [vmem:[%s220 + $0x14] sm:$0xf]
        %v266 = vld [vmem:[%s220 + $0x18] sm:$0xf]
        %v267 = vld [vmem:[%s220 + $0x1c] sm:$0xf]
        %v268 = vld [vmem:[%s220 + $0x20] sm:$0xf]
        %v269 = vld [vmem:[%s220 + $0x24] sm:$0xf]
        %v270 = vld [vmem:[%s220 + $0x28] sm:$0xf]
        %v271 = vld [vmem:[%s220 + $0x2c] sm:$0xf]
        %v272 = vld [vmem:[%s220 + $0x30] sm:$0xf]
        %v273 = vld [vmem:[%s220 + $0x34] sm:$0xf]
        %v274 = vld [vmem:[%s220 + $0x38] sm:$0xf]
        %v275 = vld [vmem:[%s220 + $0x3c] sm:$0xf]
        %v278 = vunpack.c.l.b16 %v258
        %v279 = vunpack.c.l.b16 %v259
        %v280 = vpack.c.b16 %v279, %v278
        %v298 = vunpack.c.l.b16 %v260
        %v299 = vunpack.c.l.b16 %v261
        %v300 = vunpack.c.l.b16 %v262
        %v301 = vunpack.c.l.b16 %v263
        %v302 = vunpack.c.l.b16 %v264
        %v303 = vunpack.c.l.b16 %v265
        %v304 = vunpack.c.l.b16 %v266
        %v305 = vunpack.c.l.b16 %v267
        %v306 = vunpack.c.l.b16 %v268
        %v307 = vunpack.c.l.b16 %v269
        %v308 = vunpack.c.l.b16 %v270
        %v309 = vunpack.c.l.b16 %v271
        %v310 = vunpack.c.l.b16 %v272
        %v311 = vunpack.c.l.b16 %v273
        %v312 = vunpack.c.l.b16 %v274
        %v313 = vunpack.c.l.b16 %v275
        %v314 = vpack.c.b16 %v299, %v298
        %v315 = vpack.c.b16 %v301, %v300
        %v316 = vpack.c.b16 %v303, %v302
        %v317 = vpack.c.b16 %v305, %v304
        %v318 = vpack.c.b16 %v307, %v306
        %v319 = vpack.c.b16 %v309, %v308
        %v320 = vpack.c.b16 %v311, %v310
        %v321 = vpack.c.b16 %v313, %v312
        %330 = vmatprep.subr.bf16.mxu0 0
        %331 = vmatpush1.bf16.msra.mxu0 %v314
        %332 = vmatprep.subr.bf16.mxu0 0
        %333 = vmatpush1.bf16.msra.mxu0 %v315
        %334 = vmatprep.subr.bf16.mxu0 0
        %335 = vmatpush1.bf16.msra.mxu0 %v316
        %336 = vmatprep.subr.bf16.mxu0 0
        %337 = vmatpush1.bf16.msra.mxu0 %v317
        %338 = vmatprep.subr.bf16.mxu0 0
        %339 = vmatpush1.bf16.msra.mxu0 %v318
        %340 = vmatprep.subr.bf16.mxu0 0
        %341 = vmatpush1.bf16.msra.mxu0 %v319
        %342 = vmatprep.subr.bf16.mxu0 0
        %343 = vmatpush1.bf16.msra.mxu0 %v320
        %344 = vmatprep.subr.bf16.mxu0 0
        %345 = vmatpush1.bf16.msra.mxu0 %v321
        %346 = vmatprep.subr.bf16.mxu0 0
        %347 = vmatpush1.bf16.msra.mxu0 0
        %348 = vmatprep.subr.bf16.mxu0 0
        %349 = vmatpush1.bf16.msra.mxu0 0
        %350 = vmatprep.subr.bf16.mxu0 0
        %351 = vmatpush1.bf16.msra.mxu0 0
        %352 = vmatprep.subr.bf16.mxu0 0
        %353 = vmatpush1.bf16.msra.mxu0 0
        %354 = vmatprep.subr.bf16.mxu0 0
        %355 = vmatpush1.bf16.msra.mxu0 0
        %356 = vmatprep.subr.bf16.mxu0 0
        %357 = vmatpush1.bf16.msra.mxu0 0
        %358 = vmatprep.subr.bf16.mxu0 0
        %359 = vmatpush1.bf16.msra.mxu0 0
        %360 = vmatprep.subr.bf16.mxu0 0
        %361 = vmatpush1.bf16.msra.mxu0 0
        %362 = vmatprep.mubr.bf16.mxu0 0
        %363 = vmatmul.mubr.bf16.gmra.mrb[0].mxu0 %v280
        %v364 = vpop.f32.mrb[0].mxu0
        %v365 = vadd.f32 0.0, %v364
        %v366 = vpop.f32.mrb[0].mxu0
        %v367 = vpop.f32.mrb[0].mxu0
        %v368 = vadd.f32 0.0, %v367
        %v369 = vpop.f32.mrb[0].mxu0
        %370 = vdwg.mxu0
        %v371 = vadd.f32 %v256, %v365
        %v372 = vadd.f32 %v257, %v368
        %373 = vst [vmem:[#allocation2] sm:$0xff] %v371
        %374 = vst [vmem:[#allocation2 + $0x8] sm:$0xff] %v372
        // Predicated region
        $region41: #{tpu_custom_call.1} parent=27 // pred_check
          %p375 = pneg %p250
        $region42: #{tpu_custom_call.1} parent=27 // pred_check_branch
          %377 = sbr.rel (%p375) target = $region44
        $region43: #{tpu_custom_call.1} parent=27 // pred_region
          %v378 = vld [vmem:[#allocation2] sm:$0xff]
          %v379 = vld [vmem:[#allocation2 + $0x8] sm:$0xff]
          %v380 = vmax.f32 %v378, 0.0
          %v381 = vmax.f32 %v379, 0.0
          %382 = vst [vmem:[%s245] sm:$0xff] %v380
          %383 = vst [vmem:[%s245 + $0x8] sm:$0xff] %v381
        $region44: #{tpu_custom_call.1} parent=27 // pred_fallthru
          _
        %s384 = sand.u32 %s120, 1
        %s385 = scalar_lea.sflag [#allocation5], %s384
        %s386 = sand.u32 %s120, 1
        %s387 = smul.addr %s386, 16
        %s388 = scalar_lea.vmem [#allocation8], %s387
        // Predicated region
        $region45: #{tpu_custom_call.1} parent=27 // pred_check
          %p389 = pneg %p130
        $region46: #{tpu_custom_call.1} parent=27 // pred_check_branch
          %391 = sbr.rel (%p389) target = $region48
        $region47: #{tpu_custom_call.1} parent=27 // pred_region
          %s392 = smul.u32 2, %s29
          %s394 = ssub.s32 256, 256
          %395 = vsyncadd %s385, %s394
          %s396 = sadd.s32 %s30, %s392
          %s397 = smul.addr %s28, 2
          %s398 = sadd.s32 %s396, %s397
          %s399 = smul.addr %s398, 128
          %s400 = scalar_lea.hbm %s2, %s399
          %s401 = sshll.u32 %s388, 4
          %s402 = int_to_ptr.vmem [resolvable:$true] %s401
          %407 = dma.vmem_to_hbm [thread:$0]  %s402, 256, %s400, %s385, 128, 128, 8
        $region48: #{tpu_custom_call.1} parent=27 // pred_fallthru
          _
      $region28: #{tpu_custom_call.1} parent=5 // pred_fallthru
        _
      %p408 = scmp.le.s32.totalorder 2, %s17
      // Predicated region
      $region49: #{tpu_custom_call.1} parent=5 // pred_check
        %p409 = pneg %p408
      $region50: #{tpu_custom_call.1} parent=5 // pred_check_branch
        %411 = sbr.rel (%p409) target = $region52
      $region51: #{tpu_custom_call.1} parent=5 // pred_region
        %s412 = ssub.s32 %s17, 2
        // Predicated region
        $region53: #{tpu_custom_call.1} parent=51 // pred_check
          %p413 = pneg %p136
        $region54: #{tpu_custom_call.1} parent=51 // pred_check_branch
          %415 = sbr.rel (%p413) target = $region56
        $region55: #{tpu_custom_call.1} parent=51 // pred_region
          %s416 = sand.u32 %s121, 1
          %s417 = scalar_lea.sflag [#allocation5], %s416
          %s418 = sand.u32 %s121, 1
          %s419 = smul.addr %s418, 16
          %s420 = scalar_lea.vmem [#allocation8], %s419
          %421 = dma.done %s417, 256
        $region56: #{tpu_custom_call.1} parent=51 // pred_fallthru
          _
      $region52: #{tpu_custom_call.1} parent=5 // pred_fallthru
        _
    $region6: #{tpu_custom_call.1} parent=1 // loop_footer
      %s21 = sadd.s32 1, %s17
    $region7: #{tpu_custom_call.1} parent=1 // loop_footer_branch
      %16 = sbr.rel target = $region3
    $region8: #{tpu_custom_call.1} parent=1 // loop_exit
      _
    %422 = vsyncpa [#allocation4], 1
    %s423 = scalar_lea.sflag [#allocation4], 1
    %424 = vsyncpa %s423, 1
    %425 = vsyncpa [#allocation7], 1
    %s426 = scalar_lea.sflag [#allocation7], 1
    %427 = vsyncpa %s426, 1
    %428 = vsyncpa [#allocation5], 1
    %s429 = scalar_lea.sflag [#allocation5], 1
    %430 = vsyncpa %s429, 1

</llo_original>
